<compile_context>
chip_gen: v6e
topology: v6e:2x2x1
jax: 0.10.0
libtpu: 0.0.40
codegen_flags: <defaults>
</compile_context>

<pallas_src>
import functools

import jax
import jax.numpy as jnp
from jax.experimental import pallas as pl
from jax.experimental.pallas import tpu as pltpu

LANES = 128       # TPU lane width (last-dim tiling)
SUBLANES = 8      # TPU sublane width
MAX_TB = 2048     # cap on the batch-lane tile (amortizes ~0.35us/step overhead)


def _round_up(v, m):
    return -(-v // m) * m


def _dqn_kernel(x_ref, w0_ref, w12_ref, b_ref, q_ref, *, h0, h1):
    """Fused forward in (features, batch) orientation.

    x_ref   : (D, tb)               input tile, batch on lanes
    w0_ref  : (h0, D)               fc0 weight (PyTorch (out, in) layout)
    w12_ref : (h1 + a_sub, h0)      [fc1 weight ; fc2 weight padded to a_sub rows]
    b_ref   : (h0 + h1 + a_sub, 1)  packed column biases (always f32)
    q_ref   : (a_sub, tb)           transposed Q tile (f32)
    """
    wdt = w0_ref.dtype  # bf16 on the fast path, f32 for exact PyTorch parity

    # --- fc0 + ReLU : (h0, D) @ (D, tb) -> (h0, tb), f32 accumulation -------
    a0 = jnp.dot(w0_ref[...], x_ref[...], preferred_element_type=jnp.float32)
    a0 = jnp.maximum(a0 + b_ref[:h0, :], 0.0)

    # --- fc1 + ReLU : sublane-aligned slice of the packed [W1 ; W2] slab ----
    a1 = jnp.dot(w12_ref[:h1, :], a0.astype(wdt),
                 preferred_element_type=jnp.float32)
    a1 = jnp.maximum(a1 + b_ref[h0:h0 + h1, :], 0.0)

    # --- fc2 : only a_sub (=8) output rows -> no 128-lane action padding ----
    q = jnp.dot(w12_ref[h1:, :], a1.astype(wdt),
                preferred_element_type=jnp.float32)
    q_ref[...] = q + b_ref[h0 + h1:, :]


def dqn_forward(x, params, *, hidden_dims, num_actions, use_bf16=False):
    """JAX wrapper reproducing DQN.forward(x) -> q of shape (B, num_actions)."""
    h0, h1 = hidden_dims
    B, D = x.shape

    w0t, w12t, bias = params["w0t"], params["w12t"], params["bias"]
    a_sub = w12t.shape[0] - h1
    assert num_actions <= a_sub, "num_actions must fit the padded fc2 rows"
    assert w0t.shape == (h0, D) and w12t.shape[1] == h0
    assert bias.shape == (h0 + h1 + a_sub, 1)

    # Batch-lane tile: as large as possible (<= MAX_TB) to amortize per-step
    # pipeline overhead, but split into >= 2 tiles for B > 128 so the
    # "parallel" grid axis can shard across both v7x TensorCores.
    if B <= LANES:
        tb = _round_up(B, LANES)                       # single tiny tile
    else:
        tb = min(MAX_TB, _round_up(-(-B // 2), LANES))  # aim for >= 2 tiles
    bp = _round_up(B, tb)

    # (features, batch) orientation: batch on the 128-lane axis.
    x_t = x.T                                           # (D, B)
    if bp != B:
        x_t = jnp.pad(x_t, ((0, 0), (0, bp - B)))

    if use_bf16:
        # MXU-native inputs; accumulation stays f32 (preferred_element_type).
        x_t = x_t.astype(jnp.bfloat16)
        w0t = w0t.astype(jnp.bfloat16)
        w12t = w12t.astype(jnp.bfloat16)

    kernel = functools.partial(_dqn_kernel, h0=h0, h1=h1)

    flops = 2 * bp * (D * h0 + h0 * h1 + h1 * a_sub)
    bytes_accessed = (x_t.size * x_t.dtype.itemsize
                      + w0t.size * w0t.dtype.itemsize
                      + w12t.size * w12t.dtype.itemsize
                      + bias.size * bias.dtype.itemsize
                      + a_sub * bp * 4)

    q_t = pl.pallas_call(
        kernel,
        out_shape=jax.ShapeDtypeStruct((a_sub, bp), jnp.float32),
        grid=(bp // tb,),
        in_specs=[
            pl.BlockSpec((D, tb), lambda i: (0, i)),               # x tile
            pl.BlockSpec((h0, D), lambda i: (0, 0)),               # W0^T (resident)
            pl.BlockSpec((h1 + a_sub, h0), lambda i: (0, 0)),      # [W1;W2] slab
            pl.BlockSpec((h0 + h1 + a_sub, 1), lambda i: (0, 0)),  # packed biases
        ],
        out_specs=pl.BlockSpec((a_sub, tb), lambda i: (0, i)),
        compiler_params=pltpu.CompilerParams(
            dimension_semantics=("parallel",),
            vmem_limit_bytes=32 * 1024 * 1024),
        cost_estimate=pl.CostEstimate(flops=flops, transcendentals=0,
                                      bytes_accessed=bytes_accessed),
    )(x_t, w0t, w12t, bias)

    return q_t[:num_actions, :B].T


def init_params(key, num_days, hidden_dims=(256, 256), num_actions=3):
    """PyTorch nn.Linear default init: U(-1/sqrt(fan_in), +1/sqrt(fan_in)).

    Weights are kept in PyTorch's native (out, in) layout, which is exactly
    the transposed orientation the kernel consumes.
    Returns (packed_params_for_kernel, unpacked_weights_for_reference).
    """
    h0, h1 = hidden_dims
    assert h0 == h1, "[W1;W2] slab packing assumes hidden_dims[0] == hidden_dims[1]"
    assert h0 % SUBLANES == 0 and h1 % SUBLANES == 0, \
        "hidden dims must be sublane-aligned for the packed slab/bias slices"
    a_sub = max(SUBLANES, _round_up(num_actions, SUBLANES))

    ks = jax.random.split(key, 6)

    def u(k, shape, fan_in):
        bound = 1.0 / jnp.sqrt(jnp.float32(fan_in))
        return jax.random.uniform(k, shape, jnp.float32, -bound, bound)

    w0 = u(ks[0], (h0, num_days), num_days)      # (out, in)
    b0 = u(ks[1], (h0,), num_days)
    w1 = u(ks[2], (h1, h0), h0)
    b1 = u(ks[3], (h1,), h0)
    w2 = u(ks[4], (num_actions, h1), h1)
    b2 = u(ks[5], (num_actions,), h1)

    w2p = jnp.zeros((a_sub, h1), jnp.float32).at[:num_actions, :].set(w2)
    b2p = jnp.zeros((a_sub,), jnp.float32).at[:num_actions].set(b2)

    packed = {
        "w0t": w0,                                        # (h0, D)
        "w12t": jnp.concatenate([w1, w2p], axis=0),       # (h1 + a_sub, h0)
        "bias": jnp.concatenate([b0, b1, b2p])[:, None],  # (h0 + h1 + a_sub, 1)
    }
    return packed, (w0, b0, w1, b1, w2, b2)


if __name__ == "__main__":
    NUM_DAYS = 32          # input feature size ("num_days")
    HIDDEN_DIMS = (256, 256)
    NUM_ACTIONS = 3
    BATCH = 2

    root = jax.random.PRNGKey(0)
    k_params, k_x = jax.random.split(root)

    params, ref_w = init_params(k_params, NUM_DAYS, HIDDEN_DIMS, NUM_ACTIONS)
    w0, b0, w1, b1, w2, b2 = ref_w

    def reference(xx):
        a0 = jnp.maximum(xx @ w0.T + b0, 0.0)
        a1 = jnp.maximum(a0 @ w1.T + b1, 0.0)
        return a1 @ w2.T + b2

    fwd = jax.jit(functools.partial(dqn_forward, hidden_dims=HIDDEN_DIMS,
                                    num_actions=NUM_ACTIONS))

    # Small-batch check (exact f32 semantics).
    x = jax.random.normal(k_x, (BATCH, NUM_DAYS), jnp.float32)
    q = fwd(x, params)
    jax.block_until_ready(q)
    assert q.shape == (BATCH, NUM_ACTIONS)
    assert jnp.allclose(q, reference(x), rtol=1e-5, atol=1e-5), "small-batch mismatch"

    # Gridded batch (exercises grid >= 2 / megacore path), still exact f32.
    xb = jax.random.normal(jax.random.PRNGKey(1), (512, NUM_DAYS), jnp.float32)
    qb = fwd(xb, params)
    jax.block_until_ready(qb)
    assert jnp.allclose(qb, reference(xb), rtol=1e-5, atol=1e-5), "big-batch mismatch"

    # Optional bf16 fast path (f32 accumulation) — looser tolerance.
    fwd_bf16 = jax.jit(functools.partial(dqn_forward, hidden_dims=HIDDEN_DIMS,
                                         num_actions=NUM_ACTIONS, use_bf16=True))
    qh = fwd_bf16(xb, params)
    jax.block_until_ready(qh)
    assert jnp.max(jnp.abs(qh - reference(xb))) < 0.1, "bf16 path mismatch"

    print("KERNEL_OK")
</pallas_src>

<mosaic_0001>
module attributes {stable_mosaic.version = 11 : i64} {
  func.func @_dqn_kernel(%arg0: i32, %arg1: memref<32x128xf32, #tpu.memory_space<vmem>>, %arg2: memref<256x32xf32, #tpu.memory_space<vmem>>, %arg3: memref<264x256xf32, #tpu.memory_space<vmem>>, %arg4: memref<520x1xf32, #tpu.memory_space<vmem>>, %arg5: memref<8x128xf32, #tpu.memory_space<vmem>>) attributes {dimension_semantics = [#tpu.dimension_semantics<parallel>], iteration_bounds = array<i64: 1>, scalar_prefetch = 0 : i64, scratch_operands = 0 : i64, tpu.core_type = #tpu.core_type<tc>, window_params = [{transform_indices = @transform_0, window_bounds = array<i64: 32, 128>}, {pipeline_mode = #tpu.pipeline_mode<synchronous>, transform_indices = @transform_1, window_bounds = array<i64: 256, 32>}, {pipeline_mode = #tpu.pipeline_mode<synchronous>, transform_indices = @transform_2, window_bounds = array<i64: 264, 256>}, {pipeline_mode = #tpu.pipeline_mode<synchronous>, transform_indices = @transform_3, window_bounds = array<i64: 520, 1>}, {transform_indices = @transform_4, window_bounds = array<i64: 8, 128>}]} {
    %c0 = arith.constant 0 : index
    %c0_0 = arith.constant 0 : index
    %0 = vector.load %arg2[%c0, %c0_0] : memref<256x32xf32, #tpu.memory_space<vmem>>, vector<256x32xf32>
    %c0_1 = arith.constant 0 : index
    %c0_2 = arith.constant 0 : index
    %1 = vector.load %arg1[%c0_1, %c0_2] : memref<32x128xf32, #tpu.memory_space<vmem>>, vector<32x128xf32>
    %cst = arith.constant dense<0.000000e+00> : vector<256x128xf32>
    %2 = tpu.matmul %0, %1, %cst {dimension_numbers = #tpu.dot_dimension_numbers<[1], [0], [0], [1], [0, 0, 1, 1], [], []>} : vector<256x32xf32>, vector<32x128xf32>, vector<256x128xf32> -> vector<256x128xf32>
    %c0_3 = arith.constant 0 : index
    %c0_4 = arith.constant 0 : index
    %3 = vector.load %arg4[%c0_3, %c0_4] : memref<520x1xf32, #tpu.memory_space<vmem>>, vector<256x1xf32>
    %4 = vector.broadcast %3 : vector<256x1xf32> to vector<256x128xf32>
    %5 = arith.addf %2, %4 : vector<256x128xf32>
    %cst_5 = arith.constant 0.000000e+00 : f32
    %6 = vector.broadcast %cst_5 : f32 to vector<256x128xf32>
    %7 = arith.maximumf %5, %6 : vector<256x128xf32>
    %c0_6 = arith.constant 0 : index
    %c0_7 = arith.constant 0 : index
    %8 = vector.load %arg3[%c0_6, %c0_7] : memref<264x256xf32, #tpu.memory_space<vmem>>, vector<256x256xf32>
    %cst_8 = arith.constant dense<0.000000e+00> : vector<256x128xf32>
    %9 = tpu.matmul %8, %7, %cst_8 {dimension_numbers = #tpu.dot_dimension_numbers<[1], [0], [0], [1], [0, 0, 1, 1], [], []>} : vector<256x256xf32>, vector<256x128xf32>, vector<256x128xf32> -> vector<256x128xf32>
    %c256 = arith.constant 256 : index
    %c0_9 = arith.constant 0 : index
    %10 = vector.load %arg4[%c256, %c0_9] : memref<520x1xf32, #tpu.memory_space<vmem>>, vector<256x1xf32>
    %11 = vector.broadcast %10 : vector<256x1xf32> to vector<256x128xf32>
    %12 = arith.addf %9, %11 : vector<256x128xf32>
    %cst_10 = arith.constant 0.000000e+00 : f32
    %13 = vector.broadcast %cst_10 : f32 to vector<256x128xf32>
    %14 = arith.maximumf %12, %13 : vector<256x128xf32>
    %c256_11 = arith.constant 256 : index
    %c0_12 = arith.constant 0 : index
    %15 = vector.load %arg3[%c256_11, %c0_12] : memref<264x256xf32, #tpu.memory_space<vmem>>, vector<8x256xf32>
    %cst_13 = arith.constant dense<0.000000e+00> : vector<8x128xf32>
    %16 = tpu.matmul %15, %14, %cst_13 {dimension_numbers = #tpu.dot_dimension_numbers<[1], [0], [0], [1], [0, 0, 1, 1], [], []>} : vector<8x256xf32>, vector<256x128xf32>, vector<8x128xf32> -> vector<8x128xf32>
    %c512 = arith.constant 512 : index
    %c0_14 = arith.constant 0 : index
    %17 = vector.load %arg4[%c512, %c0_14] : memref<520x1xf32, #tpu.memory_space<vmem>>, vector<8x1xf32>
    %18 = vector.broadcast %17 : vector<8x1xf32> to vector<8x128xf32>
    %19 = arith.addf %16, %18 : vector<8x128xf32>
    %c0_15 = arith.constant 0 : index
    %c0_16 = arith.constant 0 : index
    %20 = vector.load %arg5[%c0_15, %c0_16] : memref<8x128xf32, #tpu.memory_space<vmem>>, vector<8x128xf32>
    tpu.vector_store %arg5[%c0_15, %c0_16], %19 {strides = array<i32>} : memref<8x128xf32, #tpu.memory_space<vmem>>, vector<8x128xf32>,
    return
  }
  func.func @transform_0(%arg0: i32) -> (i32, i32) {
    %c0_i32 = arith.constant 0 : i32
    %c0_i32_0 = arith.constant 0 : i32
    return %c0_i32, %arg0 : i32, i32
  }
  func.func @transform_1(%arg0: i32) -> (i32, i32) {
    %c0_i32 = arith.constant 0 : i32
    %c0_i32_0 = arith.constant 0 : i32
    %c0_i32_1 = arith.constant 0 : i32
    return %c0_i32, %c0_i32_0 : i32, i32
  }
  func.func @transform_2(%arg0: i32) -> (i32, i32) {
    %c0_i32 = arith.constant 0 : i32
    %c0_i32_0 = arith.constant 0 : i32
    %c0_i32_1 = arith.constant 0 : i32
    return %c0_i32, %c0_i32_0 : i32, i32
  }
  func.func @transform_3(%arg0: i32) -> (i32, i32) {
    %c0_i32 = arith.constant 0 : i32
    %c0_i32_0 = arith.constant 0 : i32
    %c0_i32_1 = arith.constant 0 : i32
    return %c0_i32, %c0_i32_0 : i32, i32
  }
  func.func @transform_4(%arg0: i32) -> (i32, i32) {
    %c0_i32 = arith.constant 0 : i32
    %c0_i32_0 = arith.constant 0 : i32
    return %c0_i32, %arg0 : i32, i32
  }
}

</mosaic_0001>

<llo_original>
// kernel: dqn_forward.1
$region0: #{dqn_forward.1}
  #allocation0 [shape = 'u32[]', space=smem, size = 0x4, offset = 0x4, fixed_abs, tag = 'smem constant byte address 0x4 - core index']
  #allocation1 [shape = 'u32[144,128]{1,0:T(1,128)}', space=vmem, size = 0x12000, scoped, tag = 'internal scratch']
  %s0 = inlined_call_operand.vmem [shape: f32[32,128], index: 0, kind: input, shape index: {}]
  %s1 = inlined_call_operand.vmem [shape: f32[256,32], index: 1, kind: input, shape index: {}]
  %s2 = inlined_call_operand.vmem [shape: f32[264,256], index: 2, kind: input, shape index: {}]
  %s3 = inlined_call_operand.vmem [shape: f32[520,1], index: 3, kind: input, shape index: {}]
  %s4 = inlined_call_operand.vmem [shape: f32[8,128], index: 4, kind: output, shape index: {}]
  %s5 = sld [smem:[#allocation0]]
  $region26: #{dqn_forward.1} parent=0
    _
  %s7 = ssub.s32 1, %s5
  %s8 = scalar_select 0, %s7, %s5
  // Predicated region
  $region2: #{dqn_forward.1} parent=0 // pred_check
    _
  $region3: #{dqn_forward.1} parent=0 // pred_check_branch
    %10 = sbr.rel (0) target = $region5
  $region4: #{dqn_forward.1} parent=0 // pred_region
    _
  $region5: #{dqn_forward.1} parent=0 // pred_fallthru
    _
  // Predicated region
  $region6: #{dqn_forward.1} parent=0 // pred_check
    _
  $region7: #{dqn_forward.1} parent=0 // pred_check_branch
    %12 = sbr.rel (0) target = $region9
  $region8: #{dqn_forward.1} parent=0 // pred_region
    _
  $region9: #{dqn_forward.1} parent=0 // pred_fallthru
    _
  // Predicated region
  $region10: #{dqn_forward.1} parent=0 // pred_check
    _
  $region11: #{dqn_forward.1} parent=0 // pred_check_branch
    %14 = sbr.rel (0) target = $region13
  $region12: #{dqn_forward.1} parent=0 // pred_region
    _
  $region13: #{dqn_forward.1} parent=0 // pred_fallthru
    _
  // Predicated region
  $region14: #{dqn_forward.1} parent=0 // pred_check
    _
  $region15: #{dqn_forward.1} parent=0 // pred_check_branch
    %16 = sbr.rel (0) target = $region17
  $region16: #{dqn_forward.1} parent=0 // pred_region
    _
  $region17: #{dqn_forward.1} parent=0 // pred_fallthru
    _
  %v17 = vld [vmem:[%s1] sm:$0xff]
  %v18 = vld [vmem:[%s1 + $0x8] sm:$0xff]
  %v19 = vld [vmem:[%s1 + $0x10] sm:$0xff]
  %v20 = vld [vmem:[%s1 + $0x18] sm:$0xff]
  %v21 = vld [vmem:[%s1 + $0x20] sm:$0xff]
  %v22 = vld [vmem:[%s1 + $0x28] sm:$0xff]
  %v23 = vld [vmem:[%s1 + $0x30] sm:$0xff]
  %v24 = vld [vmem:[%s1 + $0x38] sm:$0xff]
  %v25 = vld [vmem:[%s1 + $0x40] sm:$0xff]
  %v26 = vld [vmem:[%s1 + $0x48] sm:$0xff]
  %v27 = vld [vmem:[%s1 + $0x50] sm:$0xff]
  %v28 = vld [vmem:[%s1 + $0x58] sm:$0xff]
  %v29 = vld [vmem:[%s1 + $0x60] sm:$0xff]
  %v30 = vld [vmem:[%s1 + $0x68] sm:$0xff]
  %v31 = vld [vmem:[%s1 + $0x70] sm:$0xff]
  %v32 = vld [vmem:[%s1 + $0x78] sm:$0xff]
  %v33 = vld [vmem:[%s1 + $0x80] sm:$0xff]
  %v34 = vld [vmem:[%s1 + $0x88] sm:$0xff]
  %v35 = vld [vmem:[%s1 + $0x90] sm:$0xff]
  %v36 = vld [vmem:[%s1 + $0x98] sm:$0xff]
  %v37 = vld [vmem:[%s1 + $0xa0] sm:$0xff]
  %v38 = vld [vmem:[%s1 + $0xa8] sm:$0xff]
  %v39 = vld [vmem:[%s1 + $0xb0] sm:$0xff]
  %v40 = vld [vmem:[%s1 + $0xb8] sm:$0xff]
  %v41 = vld [vmem:[%s1 + $0xc0] sm:$0xff]
  %v42 = vld [vmem:[%s1 + $0xc8] sm:$0xff]
  %v43 = vld [vmem:[%s1 + $0xd0] sm:$0xff]
  %v44 = vld [vmem:[%s1 + $0xd8] sm:$0xff]
  %v45 = vld [vmem:[%s1 + $0xe0] sm:$0xff]
  %v46 = vld [vmem:[%s1 + $0xe8] sm:$0xff]
  %v47 = vld [vmem:[%s1 + $0xf0] sm:$0xff]
  %v48 = vld [vmem:[%s1 + $0xf8] sm:$0xff]
  %v49 = vld [vmem:[%s0] sm:$0xff]
  %v50 = vld [vmem:[%s0 + $0x8] sm:$0xff]
  %v51 = vld [vmem:[%s0 + $0x10] sm:$0xff]
  %v52 = vld [vmem:[%s0 + $0x18] sm:$0xff]
  %v53 = vld [vmem:[%s3] sm:$0xff]
  %v54 = vld [vmem:[%s3 + $0x8] sm:$0xff]
  %v55 = vld [vmem:[%s3 + $0x10] sm:$0xff]
  %v56 = vld [vmem:[%s3 + $0x18] sm:$0xff]
  %v57 = vld [vmem:[%s3 + $0x20] sm:$0xff]
  %v58 = vld [vmem:[%s3 + $0x28] sm:$0xff]
  %v59 = vld [vmem:[%s3 + $0x30] sm:$0xff]
  %v60 = vld [vmem:[%s3 + $0x38] sm:$0xff]
  %v61 = vld [vmem:[%s3 + $0x40] sm:$0xff]
  %v62 = vld [vmem:[%s3 + $0x48] sm:$0xff]
  %v63 = vld [vmem:[%s3 + $0x50] sm:$0xff]
  %v64 = vld [vmem:[%s3 + $0x58] sm:$0xff]
  %v65 = vld [vmem:[%s3 + $0x60] sm:$0xff]
  %v66 = vld [vmem:[%s3 + $0x68] sm:$0xff]
  %v67 = vld [vmem:[%s3 + $0x70] sm:$0xff]
  %v68 = vld [vmem:[%s3 + $0x78] sm:$0xff]
  %v69 = vld [vmem:[%s3 + $0x80] sm:$0xff]
  %v70 = vld [vmem:[%s3 + $0x88] sm:$0xff]
  %v71 = vld [vmem:[%s3 + $0x90] sm:$0xff]
  %v72 = vld [vmem:[%s3 + $0x98] sm:$0xff]
  %v73 = vld [vmem:[%s3 + $0xa0] sm:$0xff]
  %v74 = vld [vmem:[%s3 + $0xa8] sm:$0xff]
  %v75 = vld [vmem:[%s3 + $0xb0] sm:$0xff]
  %v76 = vld [vmem:[%s3 + $0xb8] sm:$0xff]
  %v77 = vld [vmem:[%s3 + $0xc0] sm:$0xff]
  %v78 = vld [vmem:[%s3 + $0xc8] sm:$0xff]
  %v79 = vld [vmem:[%s3 + $0xd0] sm:$0xff]
  %v80 = vld [vmem:[%s3 + $0xd8] sm:$0xff]
  %v81 = vld [vmem:[%s3 + $0xe0] sm:$0xff]
  %v82 = vld [vmem:[%s3 + $0xe8] sm:$0xff]
  %v83 = vld [vmem:[%s3 + $0xf0] sm:$0xff]
  %v84 = vld [vmem:[%s3 + $0xf8] sm:$0xff]
  %86 = vset.pattern.permute.xlu0 0
  %87 = vperm.xlu0 %86, %v53
  %v88 = vpop.permute.xlu0 %87
  %91 = vset.pattern.permute.xlu0 0
  %92 = vperm.xlu0 %91, %v54
  %v93 = vpop.permute.xlu0 %92
  %96 = vset.pattern.permute.xlu0 0
  %97 = vperm.xlu0 %96, %v55
  %v98 = vpop.permute.xlu0 %97
  %101 = vset.pattern.permute.xlu0 0
  %102 = vperm.xlu0 %101, %v56
  %v103 = vpop.permute.xlu0 %102
  %106 = vset.pattern.permute.xlu0 0
  %107 = vperm.xlu0 %106, %v57
  %v108 = vpop.permute.xlu0 %107
  %111 = vset.pattern.permute.xlu0 0
  %112 = vperm.xlu0 %111, %v58
  %v113 = vpop.permute.xlu0 %112
  %116 = vset.pattern.permute.xlu0 0
  %117 = vperm.xlu0 %116, %v59
  %v118 = vpop.permute.xlu0 %117
  %121 = vset.pattern.permute.xlu0 0
  %122 = vperm.xlu0 %121, %v60
  %v123 = vpop.permute.xlu0 %122
  %126 = vset.pattern.permute.xlu0 0
  %127 = vperm.xlu0 %126, %v61
  %v128 = vpop.permute.xlu0 %127
  %131 = vset.pattern.permute.xlu0 0
  %132 = vperm.xlu0 %131, %v62
  %v133 = vpop.permute.xlu0 %132
  %136 = vset.pattern.permute.xlu0 0
  %137 = vperm.xlu0 %136, %v63
  %v138 = vpop.permute.xlu0 %137
  %141 = vset.pattern.permute.xlu0 0
  %142 = vperm.xlu0 %141, %v64
  %v143 = vpop.permute.xlu0 %142
  %146 = vset.pattern.permute.xlu0 0
  %147 = vperm.xlu0 %146, %v65
  %v148 = vpop.permute.xlu0 %147
  %151 = vset.pattern.permute.xlu0 0
  %152 = vperm.xlu0 %151, %v66
  %v153 = vpop.permute.xlu0 %152
  %156 = vset.pattern.permute.xlu0 0
  %157 = vperm.xlu0 %156, %v67
  %v158 = vpop.permute.xlu0 %157
  %161 = vset.pattern.permute.xlu0 0
  %162 = vperm.xlu0 %161, %v68
  %v163 = vpop.permute.xlu0 %162
  %166 = vset.pattern.permute.xlu0 0
  %167 = vperm.xlu0 %166, %v69
  %v168 = vpop.permute.xlu0 %167
  %171 = vset.pattern.permute.xlu0 0
  %172 = vperm.xlu0 %171, %v70
  %v173 = vpop.permute.xlu0 %172
  %176 = vset.pattern.permute.xlu0 0
  %177 = vperm.xlu0 %176, %v71
  %v178 = vpop.permute.xlu0 %177
  %181 = vset.pattern.permute.xlu0 0
  %182 = vperm.xlu0 %181, %v72
  %v183 = vpop.permute.xlu0 %182
  %186 = vset.pattern.permute.xlu0 0
  %187 = vperm.xlu0 %186, %v73
  %v188 = vpop.permute.xlu0 %187
  %191 = vset.pattern.permute.xlu0 0
  %192 = vperm.xlu0 %191, %v74
  %v193 = vpop.permute.xlu0 %192
  %196 = vset.pattern.permute.xlu0 0
  %197 = vperm.xlu0 %196, %v75
  %v198 = vpop.permute.xlu0 %197
  %201 = vset.pattern.permute.xlu0 0
  %202 = vperm.xlu0 %201, %v76
  %v203 = vpop.permute.xlu0 %202
  %206 = vset.pattern.permute.xlu0 0
  %207 = vperm.xlu0 %206, %v77
  %v208 = vpop.permute.xlu0 %207
  %211 = vset.pattern.permute.xlu0 0
  %212 = vperm.xlu0 %211, %v78
  %v213 = vpop.permute.xlu0 %212
  %216 = vset.pattern.permute.xlu0 0
  %217 = vperm.xlu0 %216, %v79
  %v218 = vpop.permute.xlu0 %217
  %221 = vset.pattern.permute.xlu0 0
  %222 = vperm.xlu0 %221, %v80
  %v223 = vpop.permute.xlu0 %222
  %226 = vset.pattern.permute.xlu0 0
  %227 = vperm.xlu0 %226, %v81
  %v228 = vpop.permute.xlu0 %227
  %231 = vset.pattern.permute.xlu0 0
  %232 = vperm.xlu0 %231, %v82
  %v233 = vpop.permute.xlu0 %232
  %236 = vset.pattern.permute.xlu0 0
  %237 = vperm.xlu0 %236, %v83
  %v238 = vpop.permute.xlu0 %237
  %241 = vset.pattern.permute.xlu0 0
  %242 = vperm.xlu0 %241, %v84
  %v243 = vpop.permute.xlu0 %242
  %vm245 = vcmask 261120
  %v247 = vsel %vm245, %v17, 0
  %v250 = vsel %vm245, %v18, 0
  %v253 = vsel %vm245, %v19, 0
  %v256 = vsel %vm245, %v20, 0
  %v259 = vsel %vm245, %v21, 0
  %v262 = vsel %vm245, %v22, 0
  %v265 = vsel %vm245, %v23, 0
  %v268 = vsel %vm245, %v24, 0
  %v271 = vsel %vm245, %v25, 0
  %v274 = vsel %vm245, %v26, 0
  %v277 = vsel %vm245, %v27, 0
  %v280 = vsel %vm245, %v28, 0
  %v283 = vsel %vm245, %v29, 0
  %v286 = vsel %vm245, %v30, 0
  %v289 = vsel %vm245, %v31, 0
  %v292 = vsel %vm245, %v32, 0
  %v295 = vsel %vm245, %v33, 0
  %v298 = vsel %vm245, %v34, 0
  %v301 = vsel %vm245, %v35, 0
  %v304 = vsel %vm245, %v36, 0
  %v307 = vsel %vm245, %v37, 0
  %v310 = vsel %vm245, %v38, 0
  %v313 = vsel %vm245, %v39, 0
  %v316 = vsel %vm245, %v40, 0
  %v319 = vsel %vm245, %v41, 0
  %v322 = vsel %vm245, %v42, 0
  %v325 = vsel %vm245, %v43, 0
  %v328 = vsel %vm245, %v44, 0
  %v331 = vsel %vm245, %v45, 0
  %v334 = vsel %vm245, %v46, 0
  %v337 = vsel %vm245, %v47, 0
  %v340 = vsel %vm245, %v48, 0
  %342 = vmatprep.subr.mxu0 0.0
  %343 = vmatpush1.msra.mxu0 0.0
  %344 = vmatprep.subr.mxu0 0.0
  %345 = vmatpush1.msra.mxu0 0.0
  %346 = vmatprep.subr.mxu0 0.0
  %347 = vmatpush1.msra.mxu0 0.0
  %348 = vmatprep.subr.mxu0 0.0
  %349 = vmatpush1.msra.mxu0 0.0
  %350 = vmatprep.subr.mxu0 0.0
  %351 = vmatpush1.msra.mxu0 0.0
  %352 = vmatprep.subr.mxu0 0.0
  %353 = vmatpush1.msra.mxu0 0.0
  %354 = vmatprep.subr.mxu0 0.0
  %355 = vmatpush1.msra.mxu0 0.0
  %356 = vmatprep.subr.mxu0 0.0
  %357 = vmatpush1.msra.mxu0 0.0
  %358 = vmatprep.subr.mxu0 0.0
  %359 = vmatpush1.msra.mxu0 0.0
  %360 = vmatprep.subr.mxu0 0.0
  %361 = vmatpush1.msra.mxu0 0.0
  %362 = vmatprep.subr.mxu0 0.0
  %363 = vmatpush1.msra.mxu0 0.0
  %364 = vmatprep.subr.mxu0 0.0
  %365 = vmatpush1.msra.mxu0 0.0
  %366 = vmatprep.subr.mxu0 0.0
  %367 = vmatpush1.msra.mxu0 %v52
  %368 = vmatprep.subr.mxu0 0.0
  %369 = vmatpush1.msra.mxu0 %v51
  %370 = vmatprep.subr.mxu0 0.0
  %371 = vmatpush1.msra.mxu0 %v50
  %372 = vmatprep.subr.mxu0 0.0
  %373 = vmatpush1.msra.mxu0 %v49
  %374 = vmatprep.subr.mxu0 0.0
  %375 = vmatpush2.msra.mxu0 0.0
  %376 = vmatprep.subr.mxu0 0.0
  %377 = vmatpush2.msra.mxu0 0.0
  %378 = vmatprep.subr.mxu0 0.0
  %379 = vmatpush2.msra.mxu0 0.0
  %380 = vmatprep.subr.mxu0 0.0
  %381 = vmatpush2.msra.mxu0 0.0
  %382 = vmatprep.subr.mxu0 0.0
  %383 = vmatpush2.msra.mxu0 0.0
  %384 = vmatprep.subr.mxu0 0.0
  %385 = vmatpush2.msra.mxu0 0.0
  %386 = vmatprep.subr.mxu0 0.0
  %387 = vmatpush2.msra.mxu0 0.0
  %388 = vmatprep.subr.mxu0 0.0
  %389 = vmatpush2.msra.mxu0 0.0
  %390 = vmatprep.subr.mxu0 0.0
  %391 = vmatpush2.msra.mxu0 0.0
  %392 = vmatprep.subr.mxu0 0.0
  %393 = vmatpush2.msra.mxu0 0.0
  %394 = vmatprep.subr.mxu0 0.0
  %395 = vmatpush2.msra.mxu0 0.0
  %396 = vmatprep.subr.mxu0 0.0
  %397 = vmatpush2.msra.mxu0 0.0
  %398 = vmatprep.subr.mxu0 0.0
  %399 = vmatpush2.msra.mxu0 0.0
  %400 = vmatprep.subr.mxu0 0.0
  %401 = vmatpush2.msra.mxu0 0.0
  %402 = vmatprep.subr.mxu0 0.0
  %403 = vmatpush2.msra.mxu0 0.0
  %404 = vmatprep.subr.mxu0 0.0
  %405 = vmatpush2.msra.mxu0 0.0
  %406 = vmatprep.mubr.f32.mxu0 0.0
  %407 = vmatmul.mubr.f32.gmra.mxu0 %v247
  %v408 = vpop.f32.mrf.mxu0
  %v409 = vadd.f32 %v88, %v408
  %v410 = vpop.f32.mrf.mxu0
  %411 = vmatprep.mubr.f32.mxu0 0.0
  %412 = vmatmul.mubr.f32.gmra.mxu0 %v250
  %v413 = vpop.f32.mrf.mxu0
  %v414 = vadd.f32 %v93, %v413
  %v415 = vpop.f32.mrf.mxu0
  %416 = vmatprep.mubr.f32.mxu0 0.0
  %417 = vmatmul.mubr.f32.gmra.mxu0 %v253
  %v418 = vpop.f32.mrf.mxu0
  %v419 = vadd.f32 %v98, %v418
  %v420 = vpop.f32.mrf.mxu0
  %421 = vmatprep.mubr.f32.mxu0 0.0
  %422 = vmatmul.mubr.f32.gmra.mxu0 %v256
  %v423 = vpop.f32.mrf.mxu0
  %v424 = vadd.f32 %v103, %v423
  %v425 = vpop.f32.mrf.mxu0
  %426 = vmatprep.mubr.f32.mxu0 0.0
  %427 = vmatmul.mubr.f32.gmra.mxu0 %v259
  %v428 = vpop.f32.mrf.mxu0
  %v429 = vadd.f32 %v108, %v428
  %v430 = vpop.f32.mrf.mxu0
  %431 = vmatprep.mubr.f32.mxu0 0.0
  %432 = vmatmul.mubr.f32.gmra.mxu0 %v262
  %v433 = vpop.f32.mrf.mxu0
  %v434 = vadd.f32 %v113, %v433
  %v435 = vpop.f32.mrf.mxu0
  %436 = vmatprep.mubr.f32.mxu0 0.0
  %437 = vmatmul.mubr.f32.gmra.mxu0 %v265
  %v438 = vpop.f32.mrf.mxu0
  %v439 = vadd.f32 %v118, %v438
  %v440 = vpop.f32.mrf.mxu0
  %441 = vmatprep.mubr.f32.mxu0 0.0
  %442 = vmatmul.mubr.f32.gmra.mxu0 %v268
  %v443 = vpop.f32.mrf.mxu0
  %v444 = vadd.f32 %v123, %v443
  %v445 = vpop.f32.mrf.mxu0
  %446 = vmatprep.mubr.f32.mxu0 0.0
  %447 = vmatmul.mubr.f32.gmra.mxu0 %v271
  %v448 = vpop.f32.mrf.mxu0
  %v449 = vadd.f32 %v128, %v448
  %v450 = vpop.f32.mrf.mxu0
  %451 = vmatprep.mubr.f32.mxu0 0.0
  %452 = vmatmul.mubr.f32.gmra.mxu0 %v274
  %v453 = vpop.f32.mrf.mxu0
  %v454 = vadd.f32 %v133, %v453
  %v455 = vpop.f32.mrf.mxu0
  %456 = vmatprep.mubr.f32.mxu0 0.0
  %457 = vmatmul.mubr.f32.gmra.mxu0 %v277
  %v458 = vpop.f32.mrf.mxu0
  %v459 = vadd.f32 %v138, %v458
  %v460 = vpop.f32.mrf.mxu0
  %461 = vmatprep.mubr.f32.mxu0 0.0
  %462 = vmatmul.mubr.f32.gmra.mxu0 %v280
  %v463 = vpop.f32.mrf.mxu0
  %v464 = vadd.f32 %v143, %v463
  %v465 = vpop.f32.mrf.mxu0
  %466 = vmatprep.mubr.f32.mxu0 0.0
  %467 = vmatmul.mubr.f32.gmra.mxu0 %v283
  %v468 = vpop.f32.mrf.mxu0
  %v469 = vadd.f32 %v148, %v468
  %v470 = vpop.f32.mrf.mxu0
  %471 = vmatprep.mubr.f32.mxu0 0.0
  %472 = vmatmul.mubr.f32.gmra.mxu0 %v286
  %v473 = vpop.f32.mrf.mxu0
  %v474 = vadd.f32 %v153, %v473
  %v475 = vpop.f32.mrf.mxu0
  %476 = vmatprep.mubr.f32.mxu0 0.0
  %477 = vmatmul.mubr.f32.gmra.mxu0 %v289
  %v478 = vpop.f32.mrf.mxu0
  %v479 = vadd.f32 %v158, %v478
  %v480 = vpop.f32.mrf.mxu0
  %481 = vmatprep.mubr.f32.mxu0 0.0
  %482 = vmatmul.mubr.f32.gmra.mxu0 %v292
  %v483 = vpop.f32.mrf.mxu0
  %v484 = vadd.f32 %v163, %v483
  %v485 = vpop.f32.mrf.mxu0
  %486 = vmatprep.mubr.f32.mxu0 0.0
  %487 = vmatmul.mubr.f32.gmra.mxu0 %v295
  %v488 = vpop.f32.mrf.mxu0
  %v489 = vadd.f32 %v168, %v488
  %v490 = vpop.f32.mrf.mxu0
  %491 = vmatprep.mubr.f32.mxu0 0.0
  %492 = vmatmul.mubr.f32.gmra.mxu0 %v298
  %v493 = vpop.f32.mrf.mxu0
  %v494 = vadd.f32 %v173, %v493
  %v495 = vpop.f32.mrf.mxu0
  %496 = vmatprep.mubr.f32.mxu0 0.0
  %497 = vmatmul.mubr.f32.gmra.mxu0 %v301
  %v498 = vpop.f32.mrf.mxu0
  %v499 = vadd.f32 %v178, %v498
  %v500 = vpop.f32.mrf.mxu0
  %501 = vmatprep.mubr.f32.mxu0 0.0
  %502 = vmatmul.mubr.f32.gmra.mxu0 %v304
  %v503 = vpop.f32.mrf.mxu0
  %v504 = vadd.f32 %v183, %v503
  %v505 = vpop.f32.mrf.mxu0
  %506 = vmatprep.mubr.f32.mxu0 0.0
  %507 = vmatmul.mubr.f32.gmra.mxu0 %v307
  %v508 = vpop.f32.mrf.mxu0
  %v509 = vadd.f32 %v188, %v508
  %v510 = vpop.f32.mrf.mxu0
  %511 = vmatprep.mubr.f32.mxu0 0.0
  %512 = vmatmul.mubr.f32.gmra.mxu0 %v310
  %v513 = vpop.f32.mrf.mxu0
  %v514 = vadd.f32 %v193, %v513
  %v515 = vpop.f32.mrf.mxu0
  %516 = vmatprep.mubr.f32.mxu0 0.0
  %517 = vmatmul.mubr.f32.gmra.mxu0 %v313
  %v518 = vpop.f32.mrf.mxu0
  %v519 = vadd.f32 %v198, %v518
  %v520 = vpop.f32.mrf.mxu0
  %521 = vmatprep.mubr.f32.mxu0 0.0
  %522 = vmatmul.mubr.f32.gmra.mxu0 %v316
  %v523 = vpop.f32.mrf.mxu0
  %v524 = vadd.f32 %v203, %v523
  %v525 = vpop.f32.mrf.mxu0
  %526 = vmatprep.mubr.f32.mxu0 0.0
  %527 = vmatmul.mubr.f32.gmra.mxu0 %v319
  %v528 = vpop.f32.mrf.mxu0
  %v529 = vadd.f32 %v208, %v528
  %v530 = vpop.f32.mrf.mxu0
  %531 = vmatprep.mubr.f32.mxu0 0.0
  %532 = vmatmul.mubr.f32.gmra.mxu0 %v322
  %v533 = vpop.f32.mrf.mxu0
  %v534 = vadd.f32 %v213, %v533
  %v535 = vpop.f32.mrf.mxu0
  %536 = vmatprep.mubr.f32.mxu0 0.0
  %537 = vmatmul.mubr.f32.gmra.mxu0 %v325
  %v538 = vpop.f32.mrf.mxu0
  %v539 = vadd.f32 %v218, %v538
  %v540 = vpop.f32.mrf.mxu0
  %541 = vmatprep.mubr.f32.mxu0 0.0
  %542 = vmatmul.mubr.f32.gmra.mxu0 %v328
  %v543 = vpop.f32.mrf.mxu0
  %v544 = vadd.f32 %v223, %v543
  %v545 = vpop.f32.mrf.mxu0
  %546 = vmatprep.mubr.f32.mxu0 0.0
  %547 = vmatmul.mubr.f32.gmra.mxu0 %v331
  %v548 = vpop.f32.mrf.mxu0
  %v549 = vadd.f32 %v228, %v548
  %v550 = vpop.f32.mrf.mxu0
  %551 = vmatprep.mubr.f32.mxu0 0.0
  %552 = vmatmul.mubr.f32.gmra.mxu0 %v334
  %v553 = vpop.f32.mrf.mxu0
  %v554 = vadd.f32 %v233, %v553
  %v555 = vpop.f32.mrf.mxu0
  %556 = vmatprep.mubr.f32.mxu0 0.0
  %557 = vmatmul.mubr.f32.gmra.mxu0 %v337
  %v558 = vpop.f32.mrf.mxu0
  %v559 = vadd.f32 %v238, %v558
  %v560 = vpop.f32.mrf.mxu0
  %561 = vmatprep.mubr.f32.mxu0 0.0
  %562 = vmatmul.mubr.f32.gmra.mxu0 %v340
  %v563 = vpop.f32.mrf.mxu0
  %v564 = vadd.f32 %v243, %v563
  %v565 = vpop.f32.mrf.mxu0
  %566 = vdwg.mxu0
  %v567 = vmax.f32 %v409, 0.0
  %v568 = vmax.f32 %v414, 0.0
  %v569 = vmax.f32 %v419, 0.0
  %v570 = vmax.f32 %v424, 0.0
  %v571 = vmax.f32 %v429, 0.0
  %v572 = vmax.f32 %v434, 0.0
  %v573 = vmax.f32 %v439, 0.0
  %v574 = vmax.f32 %v444, 0.0
  %v575 = vmax.f32 %v449, 0.0
  %v576 = vmax.f32 %v454, 0.0
  %v577 = vmax.f32 %v459, 0.0
  %v578 = vmax.f32 %v464, 0.0
  %v579 = vmax.f32 %v469, 0.0
  %v580 = vmax.f32 %v474, 0.0
  %v581 = vmax.f32 %v479, 0.0
  %v582 = vmax.f32 %v484, 0.0
  %v583 = vmax.f32 %v489, 0.0
  %v584 = vmax.f32 %v494, 0.0
  %v585 = vmax.f32 %v499, 0.0
  %v586 = vmax.f32 %v504, 0.0
  %v587 = vmax.f32 %v509, 0.0
  %v588 = vmax.f32 %v514, 0.0
  %v589 = vmax.f32 %v519, 0.0
  %v590 = vmax.f32 %v524, 0.0
  %v591 = vmax.f32 %v529, 0.0
  %v592 = vmax.f32 %v534, 0.0
  %v593 = vmax.f32 %v539, 0.0
  %v594 = vmax.f32 %v544, 0.0
  %v595 = vmax.f32 %v549, 0.0
  %v596 = vmax.f32 %v554, 0.0
  %v597 = vmax.f32 %v559, 0.0
  %v598 = vmax.f32 %v564, 0.0
  %v599 = vld [vmem:[%s2] sm:$0xff]
  %v600 = vld [vmem:[%s2 + $0x8] sm:$0xff]
  %v601 = vld [vmem:[%s2 + $0x10] sm:$0xff]
  %v602 = vld [vmem:[%s2 + $0x18] sm:$0xff]
  %v603 = vld [vmem:[%s2 + $0x20] sm:$0xff]
  %v604 = vld [vmem:[%s2 + $0x28] sm:$0xff]
  %v605 = vld [vmem:[%s2 + $0x30] sm:$0xff]
  %v606 = vld [vmem:[%s2 + $0x38] sm:$0xff]
  %v607 = vld [vmem:[%s2 + $0x40] sm:$0xff]
  %v608 = vld [vmem:[%s2 + $0x48] sm:$0xff]
  %v609 = vld [vmem:[%s2 + $0x50] sm:$0xff]
  %v610 = vld [vmem:[%s2 + $0x58] sm:$0xff]
  %v611 = vld [vmem:[%s2 + $0x60] sm:$0xff]
  %v612 = vld [vmem:[%s2 + $0x68] sm:$0xff]
  %v613 = vld [vmem:[%s2 + $0x70] sm:$0xff]
  %v614 = vld [vmem:[%s2 + $0x78] sm:$0xff]
  %v615 = vld [vmem:[%s2 + $0x80] sm:$0xff]
  %v616 = vld [vmem:[%s2 + $0x88] sm:$0xff]
  %v617 = vld [vmem:[%s2 + $0x90] sm:$0xff]
  %v618 = vld [vmem:[%s2 + $0x98] sm:$0xff]
  %v619 = vld [vmem:[%s2 + $0xa0] sm:$0xff]
  %v620 = vld [vmem:[%s2 + $0xa8] sm:$0xff]
  %v621 = vld [vmem:[%s2 + $0xb0] sm:$0xff]
  %v622 = vld [vmem:[%s2 + $0xb8] sm:$0xff]
  %v623 = vld [vmem:[%s2 + $0xc0] sm:$0xff]
  %v624 = vld [vmem:[%s2 + $0xc8] sm:$0xff]
  %v625 = vld [vmem:[%s2 + $0xd0] sm:$0xff]
  %v626 = vld [vmem:[%s2 + $0xd8] sm:$0xff]
  %v627 = vld [vmem:[%s2 + $0xe0] sm:$0xff]
  %v628 = vld [vmem:[%s2 + $0xe8] sm:$0xff]
  %v629 = vld [vmem:[%s2 + $0xf0] sm:$0xff]
  %v630 = vld [vmem:[%s2 + $0xf8] sm:$0xff]
  %v631 = vld [vmem:[%s2 + $0x100] sm:$0xff]
  %v632 = vld [vmem:[%s2 + $0x108] sm:$0xff]
  %v633 = vld [vmem:[%s2 + $0x110] sm:$0xff]
  %v634 = vld [vmem:[%s2 + $0x118] sm:$0xff]
  %v635 = vld [vmem:[%s2 + $0x120] sm:$0xff]
  %v636 = vld [vmem:[%s2 + $0x128] sm:$0xff]
  %v637 = vld [vmem:[%s2 + $0x130] sm:$0xff]
  %v638 = vld [vmem:[%s2 + $0x138] sm:$0xff]
  %v639 = vld [vmem:[%s2 + $0x140] sm:$0xff]
  %v640 = vld [vmem:[%s2 + $0x148] sm:$0xff]
  %v641 = vld [vmem:[%s2 + $0x150] sm:$0xff]
  %v642 = vld [vmem:[%s2 + $0x158] sm:$0xff]
  %v643 = vld [vmem:[%s2 + $0x160] sm:$0xff]
  %v644 = vld [vmem:[%s2 + $0x168] sm:$0xff]
  %v645 = vld [vmem:[%s2 + $0x170] sm:$0xff]
  %v646 = vld [vmem:[%s2 + $0x178] sm:$0xff]
  %v647 = vld [vmem:[%s2 + $0x180] sm:$0xff]
  %v648 = vld [vmem:[%s2 + $0x188] sm:$0xff]
  %v649 = vld [vmem:[%s2 + $0x190] sm:$0xff]
  %v650 = vld [vmem:[%s2 + $0x198] sm:$0xff]
  %v651 = vld [vmem:[%s2 + $0x1a0] sm:$0xff]
  %v652 = vld [vmem:[%s2 + $0x1a8] sm:$0xff]
  %v653 = vld [vmem:[%s2 + $0x1b0] sm:$0xff]
  %v654 = vld [vmem:[%s2 + $0x1b8] sm:$0xff]
  %v655 = vld [vmem:[%s2 + $0x1c0] sm:$0xff]
  %v656 = vld [vmem:[%s2 + $0x1c8] sm:$0xff]
  %v657 = vld [vmem:[%s2 + $0x1d0] sm:$0xff]
  %v658 = vld [vmem:[%s2 + $0x1d8] sm:$0xff]
  %v659 = vld [vmem:[%s2 + $0x1e0] sm:$0xff]
  %v660 = vld [vmem:[%s2 + $0x1e8] sm:$0xff]
  %v661 = vld [vmem:[%s2 + $0x1f0] sm:$0xff]
  %v662 = vld [vmem:[%s2 + $0x1f8] sm:$0xff]
  %v663 = vld [vmem:[%s3 + $0x100] sm:$0xff]
  %v664 = vld [vmem:[%s3 + $0x108] sm:$0xff]
  %v665 = vld [vmem:[%s3 + $0x110] sm:$0xff]
  %v666 = vld [vmem:[%s3 + $0x118] sm:$0xff]
  %v667 = vld [vmem:[%s3 + $0x120] sm:$0xff]
  %v668 = vld [vmem:[%s3 + $0x128] sm:$0xff]
  %v669 = vld [vmem:[%s3 + $0x130] sm:$0xff]
  %v670 = vld [vmem:[%s3 + $0x138] sm:$0xff]
  %v671 = vld [vmem:[%s3 + $0x140] sm:$0xff]
  %v672 = vld [vmem:[%s3 + $0x148] sm:$0xff]
  %v673 = vld [vmem:[%s3 + $0x150] sm:$0xff]
  %v674 = vld [vmem:[%s3 + $0x158] sm:$0xff]
  %v675 = vld [vmem:[%s3 + $0x160] sm:$0xff]
  %v676 = vld [vmem:[%s3 + $0x168] sm:$0xff]
  %v677 = vld [vmem:[%s3 + $0x170] sm:$0xff]
  %v678 = vld [vmem:[%s3 + $0x178] sm:$0xff]
  %v679 = vld [vmem:[%s3 + $0x180] sm:$0xff]
  %v680 = vld [vmem:[%s3 + $0x188] sm:$0xff]
  %v681 = vld [vmem:[%s3 + $0x190] sm:$0xff]
  %v682 = vld [vmem:[%s3 + $0x198] sm:$0xff]
  %v683 = vld [vmem:[%s3 + $0x1a0] sm:$0xff]
  %v684 = vld [vmem:[%s3 + $0x1a8] sm:$0xff]
  %v685 = vld [vmem:[%s3 + $0x1b0] sm:$0xff]
  %v686 = vld [vmem:[%s3 + $0x1b8] sm:$0xff]
  %v687 = vld [vmem:[%s3 + $0x1c0] sm:$0xff]
  %v688 = vld [vmem:[%s3 + $0x1c8] sm:$0xff]
  %v689 = vld [vmem:[%s3 + $0x1d0] sm:$0xff]
  %v690 = vld [vmem:[%s3 + $0x1d8] sm:$0xff]
  %v691 = vld [vmem:[%s3 + $0x1e0] sm:$0xff]
  %v692 = vld [vmem:[%s3 + $0x1e8] sm:$0xff]
  %v693 = vld [vmem:[%s3 + $0x1f0] sm:$0xff]
  %v694 = vld [vmem:[%s3 + $0x1f8] sm:$0xff]
  %696 = vset.pattern.permute.xlu0 0
  %697 = vperm.xlu0 %696, %v663
  %v698 = vpop.permute.xlu0 %697
  %701 = vset.pattern.permute.xlu0 0
  %702 = vperm.xlu0 %701, %v664
  %v703 = vpop.permute.xlu0 %702
  %706 = vset.pattern.permute.xlu0 0
  %707 = vperm.xlu0 %706, %v665
  %v708 = vpop.permute.xlu0 %707
  %711 = vset.pattern.permute.xlu0 0
  %712 = vperm.xlu0 %711, %v666
  %v713 = vpop.permute.xlu0 %712
  %716 = vset.pattern.permute.xlu0 0
  %717 = vperm.xlu0 %716, %v667
  %v718 = vpop.permute.xlu0 %717
  %721 = vset.pattern.permute.xlu0 0
  %722 = vperm.xlu0 %721, %v668
  %v723 = vpop.permute.xlu0 %722
  %726 = vset.pattern.permute.xlu0 0
  %727 = vperm.xlu0 %726, %v669
  %v728 = vpop.permute.xlu0 %727
  %731 = vset.pattern.permute.xlu0 0
  %732 = vperm.xlu0 %731, %v670
  %v733 = vpop.permute.xlu0 %732
  %736 = vset.pattern.permute.xlu0 0
  %737 = vperm.xlu0 %736, %v671
  %v738 = vpop.permute.xlu0 %737
  %741 = vset.pattern.permute.xlu0 0
  %742 = vperm.xlu0 %741, %v672
  %v743 = vpop.permute.xlu0 %742
  %746 = vset.pattern.permute.xlu0 0
  %747 = vperm.xlu0 %746, %v673
  %v748 = vpop.permute.xlu0 %747
  %751 = vset.pattern.permute.xlu0 0
  %752 = vperm.xlu0 %751, %v674
  %v753 = vpop.permute.xlu0 %752
  %756 = vset.pattern.permute.xlu0 0
  %757 = vperm.xlu0 %756, %v675
  %v758 = vpop.permute.xlu0 %757
  %761 = vset.pattern.permute.xlu0 0
  %762 = vperm.xlu0 %761, %v676
  %v763 = vpop.permute.xlu0 %762
  %766 = vset.pattern.permute.xlu0 0
  %767 = vperm.xlu0 %766, %v677
  %v768 = vpop.permute.xlu0 %767
  %771 = vset.pattern.permute.xlu0 0
  %772 = vperm.xlu0 %771, %v678
  %v773 = vpop.permute.xlu0 %772
  %776 = vset.pattern.permute.xlu0 0
  %777 = vperm.xlu0 %776, %v679
  %v778 = vpop.permute.xlu0 %777
  %781 = vset.pattern.permute.xlu0 0
  %782 = vperm.xlu0 %781, %v680
  %v783 = vpop.permute.xlu0 %782
  %786 = vset.pattern.permute.xlu0 0
  %787 = vperm.xlu0 %786, %v681
  %v788 = vpop.permute.xlu0 %787
  %791 = vset.pattern.permute.xlu0 0
  %792 = vperm.xlu0 %791, %v682
  %v793 = vpop.permute.xlu0 %792
  %796 = vset.pattern.permute.xlu0 0
  %797 = vperm.xlu0 %796, %v683
  %v798 = vpop.permute.xlu0 %797
  %801 = vset.pattern.permute.xlu0 0
  %802 = vperm.xlu0 %801, %v684
  %v803 = vpop.permute.xlu0 %802
  %806 = vset.pattern.permute.xlu0 0
  %807 = vperm.xlu0 %806, %v685
  %v808 = vpop.permute.xlu0 %807
  %811 = vset.pattern.permute.xlu0 0
  %812 = vperm.xlu0 %811, %v686
  %v813 = vpop.permute.xlu0 %812
  %816 = vset.pattern.permute.xlu0 0
  %817 = vperm.xlu0 %816, %v687
  %v818 = vpop.permute.xlu0 %817
  %821 = vset.pattern.permute.xlu0 0
  %822 = vperm.xlu0 %821, %v688
  %v823 = vpop.permute.xlu0 %822
  %826 = vset.pattern.permute.xlu0 0
  %827 = vperm.xlu0 %826, %v689
  %v828 = vpop.permute.xlu0 %827
  %831 = vset.pattern.permute.xlu0 0
  %832 = vperm.xlu0 %831, %v690
  %v833 = vpop.permute.xlu0 %832
  %836 = vset.pattern.permute.xlu0 0
  %837 = vperm.xlu0 %836, %v691
  %v838 = vpop.permute.xlu0 %837
  %841 = vset.pattern.permute.xlu0 0
  %842 = vperm.xlu0 %841, %v692
  %v843 = vpop.permute.xlu0 %842
  %846 = vset.pattern.permute.xlu0 0
  %847 = vperm.xlu0 %846, %v693
  %v848 = vpop.permute.xlu0 %847
  %851 = vset.pattern.permute.xlu0 0
  %852 = vperm.xlu0 %851, %v694
  %v853 = vpop.permute.xlu0 %852
  %855 = vmatprep.subr.mxu0 0.0
  %856 = vmatpush1.msra.mxu0 %v582
  %857 = vmatprep.subr.mxu0 0.0
  %858 = vmatpush1.msra.mxu0 %v581
  %859 = vmatprep.subr.mxu0 0.0
  %860 = vmatpush1.msra.mxu0 %v580
  %861 = vmatprep.subr.mxu0 0.0
  %862 = vmatpush1.msra.mxu0 %v579
  %863 = vmatprep.subr.mxu0 0.0
  %864 = vmatpush1.msra.mxu0 %v578
  %865 = vmatprep.subr.mxu0 0.0
  %866 = vmatpush1.msra.mxu0 %v577
  %867 = vmatprep.subr.mxu0 0.0
  %868 = vmatpush1.msra.mxu0 %v576
  %869 = vmatprep.subr.mxu0 0.0
  %870 = vmatpush1.msra.mxu0 %v575
  %871 = vmatprep.subr.mxu0 0.0
  %872 = vmatpush1.msra.mxu0 %v574
  %873 = vmatprep.subr.mxu0 0.0
  %874 = vmatpush1.msra.mxu0 %v573
  %875 = vmatprep.subr.mxu0 0.0
  %876 = vmatpush1.msra.mxu0 %v572
  %877 = vmatprep.subr.mxu0 0.0
  %878 = vmatpush1.msra.mxu0 %v571
  %879 = vmatprep.subr.mxu0 0.0
  %880 = vmatpush1.msra.mxu0 %v570
  %881 = vmatprep.subr.mxu0 0.0
  %882 = vmatpush1.msra.mxu0 %v569
  %883 = vmatprep.subr.mxu0 0.0
  %884 = vmatpush1.msra.mxu0 %v568
  %885 = vmatprep.subr.mxu0 0.0
  %886 = vmatpush1.msra.mxu0 %v567
  %887 = vmatprep.subr.mxu0 0.0
  %888 = vmatpush2.msra.mxu0 %v598
  %889 = vmatprep.subr.mxu0 0.0
  %890 = vmatpush2.msra.mxu0 %v597
  %891 = vmatprep.subr.mxu0 0.0
  %892 = vmatpush2.msra.mxu0 %v596
  %893 = vmatprep.subr.mxu0 0.0
  %894 = vmatpush2.msra.mxu0 %v595
  %895 = vmatprep.subr.mxu0 0.0
  %896 = vmatpush2.msra.mxu0 %v594
  %897 = vmatprep.subr.mxu0 0.0
  %898 = vmatpush2.msra.mxu0 %v593
  %899 = vmatprep.subr.mxu0 0.0
  %900 = vmatpush2.msra.mxu0 %v592
  %901 = vmatprep.subr.mxu0 0.0
  %902 = vmatpush2.msra.mxu0 %v591
  %903 = vmatprep.subr.mxu0 0.0
  %904 = vmatpush2.msra.mxu0 %v590
  %905 = vmatprep.subr.mxu0 0.0
  %906 = vmatpush2.msra.mxu0 %v589
  %907 = vmatprep.subr.mxu0 0.0
  %908 = vmatpush2.msra.mxu0 %v588
  %909 = vmatprep.subr.mxu0 0.0
  %910 = vmatpush2.msra.mxu0 %v587
  %911 = vmatprep.subr.mxu0 0.0
  %912 = vmatpush2.msra.mxu0 %v586
  %913 = vmatprep.subr.mxu0 0.0
  %914 = vmatpush2.msra.mxu0 %v585
  %915 = vmatprep.subr.mxu0 0.0
  %916 = vmatpush2.msra.mxu0 %v584
  %917 = vmatprep.subr.mxu0 0.0
  %918 = vmatpush2.msra.mxu0 %v583
  %919 = vmatprep.mubr.f32.mxu0 %v600
  %920 = vmatmul.mubr.f32.gmra.mxu0 %v599
  %v921 = vpop.f32.mrf.mxu0
  %v922 = vadd.f32 %v698, %v921
  %v923 = vpop.f32.mrf.mxu0
  %924 = vmatprep.mubr.f32.mxu0 %v602
  %925 = vmatmul.mubr.f32.gmra.mxu0 %v601
  %v926 = vpop.f32.mrf.mxu0
  %v927 = vadd.f32 %v703, %v926
  %v928 = vpop.f32.mrf.mxu0
  %929 = vmatprep.mubr.f32.mxu0 %v604
  %930 = vmatmul.mubr.f32.gmra.mxu0 %v603
  %v931 = vpop.f32.mrf.mxu0
  %v932 = vadd.f32 %v708, %v931
  %v933 = vpop.f32.mrf.mxu0
  %934 = vmatprep.mubr.f32.mxu0 %v606
  %935 = vmatmul.mubr.f32.gmra.mxu0 %v605
  %v936 = vpop.f32.mrf.mxu0
  %v937 = vadd.f32 %v713, %v936
  %v938 = vpop.f32.mrf.mxu0
  %939 = vmatprep.mubr.f32.mxu0 %v608
  %940 = vmatmul.mubr.f32.gmra.mxu0 %v607
  %v941 = vpop.f32.mrf.mxu0
  %v942 = vadd.f32 %v718, %v941
  %v943 = vpop.f32.mrf.mxu0
  %944 = vmatprep.mubr.f32.mxu0 %v610
  %945 = vmatmul.mubr.f32.gmra.mxu0 %v609
  %v946 = vpop.f32.mrf.mxu0
  %v947 = vadd.f32 %v723, %v946
  %v948 = vpop.f32.mrf.mxu0
  %949 = vmatprep.mubr.f32.mxu0 %v612
  %950 = vmatmul.mubr.f32.gmra.mxu0 %v611
  %v951 = vpop.f32.mrf.mxu0
  %v952 = vadd.f32 %v728, %v951
  %v953 = vpop.f32.mrf.mxu0
  %954 = vmatprep.mubr.f32.mxu0 %v614
  %955 = vmatmul.mubr.f32.gmra.mxu0 %v613
  %v956 = vpop.f32.mrf.mxu0
  %v957 = vadd.f32 %v733, %v956
  %v958 = vpop.f32.mrf.mxu0
  %959 = vmatprep.mubr.f32.mxu0 %v616
  %960 = vmatmul.mubr.f32.gmra.mxu0 %v615
  %v961 = vpop.f32.mrf.mxu0
  %v962 = vadd.f32 %v738, %v961
  %v963 = vpop.f32.mrf.mxu0
  %964 = vmatprep.mubr.f32.mxu0 %v618
  %965 = vmatmul.mubr.f32.gmra.mxu0 %v617
  %v966 = vpop.f32.mrf.mxu0
  %v967 = vadd.f32 %v743, %v966
  %v968 = vpop.f32.mrf.mxu0
  %969 = vmatprep.mubr.f32.mxu0 %v620
  %970 = vmatmul.mubr.f32.gmra.mxu0 %v619
  %v971 = vpop.f32.mrf.mxu0
  %v972 = vadd.f32 %v748, %v971
  %v973 = vpop.f32.mrf.mxu0
  %974 = vmatprep.mubr.f32.mxu0 %v622
  %975 = vmatmul.mubr.f32.gmra.mxu0 %v621
  %v976 = vpop.f32.mrf.mxu0
  %v977 = vadd.f32 %v753, %v976
  %v978 = vpop.f32.mrf.mxu0
  %979 = vmatprep.mubr.f32.mxu0 %v624
  %980 = vmatmul.mubr.f32.gmra.mxu0 %v623
  %v981 = vpop.f32.mrf.mxu0
  %v982 = vadd.f32 %v758, %v981
  %v983 = vpop.f32.mrf.mxu0
  %984 = vmatprep.mubr.f32.mxu0 %v626
  %985 = vmatmul.mubr.f32.gmra.mxu0 %v625
  %v986 = vpop.f32.mrf.mxu0
  %v987 = vadd.f32 %v763, %v986
  %v988 = vpop.f32.mrf.mxu0
  %989 = vmatprep.mubr.f32.mxu0 %v628
  %990 = vmatmul.mubr.f32.gmra.mxu0 %v627
  %v991 = vpop.f32.mrf.mxu0
  %v992 = vadd.f32 %v768, %v991
  %v993 = vpop.f32.mrf.mxu0
  %994 = vmatprep.mubr.f32.mxu0 %v630
  %995 = vmatmul.mubr.f32.gmra.mxu0 %v629
  %v996 = vpop.f32.mrf.mxu0
  %v997 = vadd.f32 %v773, %v996
  %v998 = vpop.f32.mrf.mxu0
  %999 = vmatprep.mubr.f32.mxu0 %v632
  %1000 = vmatmul.mubr.f32.gmra.mxu0 %v631
  %v1001 = vpop.f32.mrf.mxu0
  %v1002 = vadd.f32 %v778, %v1001
  %v1003 = vpop.f32.mrf.mxu0
  %1004 = vmatprep.mubr.f32.mxu0 %v634
  %1005 = vmatmul.mubr.f32.gmra.mxu0 %v633
  %v1006 = vpop.f32.mrf.mxu0
  %v1007 = vadd.f32 %v783, %v1006
  %v1008 = vpop.f32.mrf.mxu0
  %1009 = vmatprep.mubr.f32.mxu0 %v636
  %1010 = vmatmul.mubr.f32.gmra.mxu0 %v635
  %v1011 = vpop.f32.mrf.mxu0
  %v1012 = vadd.f32 %v788, %v1011
  %v1013 = vpop.f32.mrf.mxu0
  %1014 = vmatprep.mubr.f32.mxu0 %v638
  %1015 = vmatmul.mubr.f32.gmra.mxu0 %v637
  %v1016 = vpop.f32.mrf.mxu0
  %v1017 = vadd.f32 %v793, %v1016
  %v1018 = vpop.f32.mrf.mxu0
  %1019 = vmatprep.mubr.f32.mxu0 %v640
  %1020 = vmatmul.mubr.f32.gmra.mxu0 %v639
  %v1021 = vpop.f32.mrf.mxu0
  %v1022 = vadd.f32 %v798, %v1021
  %v1023 = vpop.f32.mrf.mxu0
  %1024 = vmatprep.mubr.f32.mxu0 %v642
  %1025 = vmatmul.mubr.f32.gmra.mxu0 %v641
  %v1026 = vpop.f32.mrf.mxu0
  %v1027 = vadd.f32 %v803, %v1026
  %v1028 = vpop.f32.mrf.mxu0
  %1029 = vmatprep.mubr.f32.mxu0 %v644
  %1030 = vmatmul.mubr.f32.gmra.mxu0 %v643
  %v1031 = vpop.f32.mrf.mxu0
  %v1032 = vadd.f32 %v808, %v1031
  %v1033 = vpop.f32.mrf.mxu0
  %1034 = vmatprep.mubr.f32.mxu0 %v646
  %1035 = vmatmul.mubr.f32.gmra.mxu0 %v645
  %v1036 = vpop.f32.mrf.mxu0
  %v1037 = vadd.f32 %v813, %v1036
  %v1038 = vpop.f32.mrf.mxu0
  %1039 = vmatprep.mubr.f32.mxu0 %v648
  %1040 = vmatmul.mubr.f32.gmra.mxu0 %v647
  %v1041 = vpop.f32.mrf.mxu0
  %v1042 = vadd.f32 %v818, %v1041
  %v1043 = vpop.f32.mrf.mxu0
  %1044 = vmatprep.mubr.f32.mxu0 %v650
  %1045 = vmatmul.mubr.f32.gmra.mxu0 %v649
  %v1046 = vpop.f32.mrf.mxu0
  %v1047 = vadd.f32 %v823, %v1046
  %v1048 = vpop.f32.mrf.mxu0
  %1049 = vmatprep.mubr.f32.mxu0 %v652
  %1050 = vmatmul.mubr.f32.gmra.mxu0 %v651
  %v1051 = vpop.f32.mrf.mxu0
  %v1052 = vadd.f32 %v828, %v1051
  %v1053 = vpop.f32.mrf.mxu0
  %1054 = vmatprep.mubr.f32.mxu0 %v654
  %1055 = vmatmul.mubr.f32.gmra.mxu0 %v653
  %v1056 = vpop.f32.mrf.mxu0
  %v1057 = vadd.f32 %v833, %v1056
  %v1058 = vpop.f32.mrf.mxu0
  %1059 = vmatprep.mubr.f32.mxu0 %v656
  %1060 = vmatmul.mubr.f32.gmra.mxu0 %v655
  %v1061 = vpop.f32.mrf.mxu0
  %v1062 = vadd.f32 %v838, %v1061
  %v1063 = vpop.f32.mrf.mxu0
  %1064 = vmatprep.mubr.f32.mxu0 %v658
  %1065 = vmatmul.mubr.f32.gmra.mxu0 %v657
  %v1066 = vpop.f32.mrf.mxu0
  %v1067 = vadd.f32 %v843, %v1066
  %v1068 = vpop.f32.mrf.mxu0
  %1069 = vmatprep.mubr.f32.mxu0 %v660
  %1070 = vmatmul.mubr.f32.gmra.mxu0 %v659
  %v1071 = vpop.f32.mrf.mxu0
  %v1072 = vadd.f32 %v848, %v1071
  %v1073 = vpop.f32.mrf.mxu0
  %1074 = vmatprep.mubr.f32.mxu0 %v662
  %1075 = vmatmul.mubr.f32.gmra.mxu0 %v661
  %v1076 = vpop.f32.mrf.mxu0
  %v1077 = vadd.f32 %v853, %v1076
  %v1078 = vpop.f32.mrf.mxu0
  %1079 = vdwg.mxu0
  %v1080 = vmax.f32 %v922, 0.0
  %v1081 = vmax.f32 %v927, 0.0
  %v1082 = vmax.f32 %v932, 0.0
  %v1083 = vmax.f32 %v937, 0.0
  %v1084 = vmax.f32 %v942, 0.0
  %v1085 = vmax.f32 %v947, 0.0
  %v1086 = vmax.f32 %v952, 0.0
  %v1087 = vmax.f32 %v957, 0.0
  %v1088 = vmax.f32 %v962, 0.0
  %v1089 = vmax.f32 %v967, 0.0
  %v1090 = vmax.f32 %v972, 0.0
  %v1091 = vmax.f32 %v977, 0.0
  %v1092 = vmax.f32 %v982, 0.0
  %v1093 = vmax.f32 %v987, 0.0
  %v1094 = vmax.f32 %v992, 0.0
  %v1095 = vmax.f32 %v997, 0.0
  %v1096 = vmax.f32 %v1002, 0.0
  %v1097 = vmax.f32 %v1007, 0.0
  %v1098 = vmax.f32 %v1012, 0.0
  %v1099 = vmax.f32 %v1017, 0.0
  %v1100 = vmax.f32 %v1022, 0.0
  %v1101 = vmax.f32 %v1027, 0.0
  %v1102 = vmax.f32 %v1032, 0.0
  %v1103 = vmax.f32 %v1037, 0.0
  %v1104 = vmax.f32 %v1042, 0.0
  %v1105 = vmax.f32 %v1047, 0.0
  %v1106 = vmax.f32 %v1052, 0.0
  %v1107 = vmax.f32 %v1057, 0.0
  %v1108 = vmax.f32 %v1062, 0.0
  %v1109 = vmax.f32 %v1067, 0.0
  %v1110 = vmax.f32 %v1072, 0.0
  %v1111 = vmax.f32 %v1077, 0.0
  %v1112 = vld [vmem:[%s2 + $0x200] sm:$0xff]
  %v1113 = vld [vmem:[%s2 + $0x208] sm:$0xff]
  %v1114 = vld [vmem:[%s3 + $0x200] sm:$0xff]
  %1116 = vset.pattern.permute.xlu0 0
  %1117 = vperm.xlu0 %1116, %v1114
  %v1118 = vpop.permute.xlu0 %1117
  %1120 = vmatprep.subr.mxu0 0.0
  %1121 = vmatpush1.msra.mxu0 %v1095
  %1122 = vmatprep.subr.mxu0 0.0
  %1123 = vmatpush1.msra.mxu0 %v1094
  %1124 = vmatprep.subr.mxu0 0.0
  %1125 = vmatpush1.msra.mxu0 %v1093
  %1126 = vmatprep.subr.mxu0 0.0
  %1127 = vmatpush1.msra.mxu0 %v1092
  %1128 = vmatprep.subr.mxu0 0.0
  %1129 = vmatpush1.msra.mxu0 %v1091
  %1130 = vmatprep.subr.mxu0 0.0
  %1131 = vmatpush1.msra.mxu0 %v1090
  %1132 = vmatprep.subr.mxu0 0.0
  %1133 = vmatpush1.msra.mxu0 %v1089
  %1134 = vmatprep.subr.mxu0 0.0
  %1135 = vmatpush1.msra.mxu0 %v1088
  %1136 = vmatprep.subr.mxu0 0.0
  %1137 = vmatpush1.msra.mxu0 %v1087
  %1138 = vmatprep.subr.mxu0 0.0
  %1139 = vmatpush1.msra.mxu0 %v1086
  %1140 = vmatprep.subr.mxu0 0.0
  %1141 = vmatpush1.msra.mxu0 %v1085
  %1142 = vmatprep.subr.mxu0 0.0
  %1143 = vmatpush1.msra.mxu0 %v1084
  %1144 = vmatprep.subr.mxu0 0.0
  %1145 = vmatpush1.msra.mxu0 %v1083
  %1146 = vmatprep.subr.mxu0 0.0
  %1147 = vmatpush1.msra.mxu0 %v1082
  %1148 = vmatprep.subr.mxu0 0.0
  %1149 = vmatpush1.msra.mxu0 %v1081
  %1150 = vmatprep.subr.mxu0 0.0
  %1151 = vmatpush1.msra.mxu0 %v1080
  %1152 = vmatprep.subr.mxu0 0.0
  %1153 = vmatpush2.msra.mxu0 %v1111
  %1154 = vmatprep.subr.mxu0 0.0
  %1155 = vmatpush2.msra.mxu0 %v1110
  %1156 = vmatprep.subr.mxu0 0.0
  %1157 = vmatpush2.msra.mxu0 %v1109
  %1158 = vmatprep.subr.mxu0 0.0
  %1159 = vmatpush2.msra.mxu0 %v1108
  %1160 = vmatprep.subr.mxu0 0.0
  %1161 = vmatpush2.msra.mxu0 %v1107
  %1162 = vmatprep.subr.mxu0 0.0
  %1163 = vmatpush2.msra.mxu0 %v1106
  %1164 = vmatprep.subr.mxu0 0.0
  %1165 = vmatpush2.msra.mxu0 %v1105
  %1166 = vmatprep.subr.mxu0 0.0
  %1167 = vmatpush2.msra.mxu0 %v1104
  %1168 = vmatprep.subr.mxu0 0.0
  %1169 = vmatpush2.msra.mxu0 %v1103
  %1170 = vmatprep.subr.mxu0 0.0
  %1171 = vmatpush2.msra.mxu0 %v1102
  %1172 = vmatprep.subr.mxu0 0.0
  %1173 = vmatpush2.msra.mxu0 %v1101
  %1174 = vmatprep.subr.mxu0 0.0
  %1175 = vmatpush2.msra.mxu0 %v1100
  %1176 = vmatprep.subr.mxu0 0.0
  %1177 = vmatpush2.msra.mxu0 %v1099
  %1178 = vmatprep.subr.mxu0 0.0
  %1179 = vmatpush2.msra.mxu0 %v1098
  %1180 = vmatprep.subr.mxu0 0.0
  %1181 = vmatpush2.msra.mxu0 %v1097
  %1182 = vmatprep.subr.mxu0 0.0
  %1183 = vmatpush2.msra.mxu0 %v1096
  %1184 = vmatprep.mubr.f32.mxu0 %v1113
  %1185 = vmatmul.mubr.f32.gmra.mxu0 %v1112
  %v1186 = vpop.f32.mrf.mxu0
  %v1187 = vadd.f32 %v1118, %v1186
  %v1188 = vpop.f32.mrf.mxu0
  %1189 = vdwg.mxu0
  %1190 = vst [vmem:[%s4] sm:$0xff] %v1187
  // Predicated region
  $region18: #{dqn_forward.1} parent=0 // pred_check
    _
  $region19: #{dqn_forward.1} parent=0 // pred_check_branch
    %1192 = sbr.rel (0) target = $region21
  $region20: #{dqn_forward.1} parent=0 // pred_region
    _
  $region21: #{dqn_forward.1} parent=0 // pred_fallthru
    _
  // Predicated region
  $region22: #{dqn_forward.1} parent=0 // pred_check
    _
  $region23: #{dqn_forward.1} parent=0 // pred_check_branch
    %1194 = sbr.rel (0) target = $region25
  $region24: #{dqn_forward.1} parent=0 // pred_region
    _
  $region25: #{dqn_forward.1} parent=0 // pred_fallthru
    _

</llo_original>
